<compile_context>
chip_gen: v7x
topology: tpu7x:2x2x1
jax: 0.10.0
libtpu: 0.0.40
codegen_flags: <defaults>
</compile_context>

<pallas_src>
import functools
import math

import jax
import jax.numpy as jnp
from jax import lax
from jax.experimental import pallas as pl
from jax.experimental.pallas import tpu as pltpu


# ----------------------------------------------------------------------------
# Pallas GEMM kernels (bf16 inputs, f32 accumulation, fused bias + ReLU)
# ----------------------------------------------------------------------------
def _mm_kernel_single(a_ref, b_ref, bias_ref, o_ref, *, relu):
    """Single K step: no accumulator scratch, no init/finalize branches."""
    r = jnp.dot(a_ref[...], b_ref[...],
                preferred_element_type=jnp.float32) + bias_ref[...]
    if relu:
        r = jnp.maximum(r, 0.0)
    o_ref[...] = r.astype(o_ref.dtype)


def _mm_kernel_multi(a_ref, b_ref, bias_ref, o_ref, acc_ref, *, relu):
    k = pl.program_id(2)

    @pl.when(k == 0)
    def _init():
        acc_ref[...] = jnp.zeros_like(acc_ref)

    acc_ref[...] += jnp.dot(a_ref[...], b_ref[...],
                            preferred_element_type=jnp.float32)

    @pl.when(k == pl.num_programs(2) - 1)
    def _finalize():
        r = acc_ref[...] + bias_ref[...]
        if relu:
            r = jnp.maximum(r, 0.0)
        o_ref[...] = r.astype(o_ref.dtype)


def _round_up(x, m):
    return (x + m - 1) // m * m


_VMEM_LIMIT = 32 * 1024 * 1024   # fits v5e 16MiB-default bump & v7x 64MiB VMEM


def pallas_matmul(a, b, bias=None, relu=False, out_dtype=jnp.float32):
    """a: (M, K) @ b: (K, N) + bias (N,), optional fused ReLU.

    a / b are cast to bf16 (if not already); accumulation is f32 on the MXU.
    """
    M, K = a.shape
    K2, N = b.shape
    assert K == K2
    if bias is None:
        bias = jnp.zeros((N,), jnp.float32)
    bias = bias.astype(jnp.float32)

    if a.dtype != jnp.bfloat16:
        a = a.astype(jnp.bfloat16)
    if b.dtype != jnp.bfloat16:
        b = b.astype(jnp.bfloat16)

    # ---- tile selection ------------------------------------------------
    Mp8 = _round_up(M, 8)
    tm = min(512, Mp8)
    Mp = _round_up(M, tm)

    N128 = _round_up(N, 128)
    tn = 128
    for cand in (512, 384, 256, 128):
        if N128 % cand == 0:
            tn = cand
            break
    Np = N128

    K128 = _round_up(K, 128)
    if K128 <= 2048:                       # collapse the reduction axis
        Kp, tk = K128, K128
    else:
        Kp, tk = None, None
        for cand in (1024, 768, 512):
            if K128 % cand == 0:
                Kp, tk = K128, cand
                break
        if tk is None:
            Kp, tk = _round_up(K, 512), 512

    # ---- padding (skipped when already aligned) ------------------------
    if (Mp, Kp) != (M, K):
        a = jnp.pad(a, ((0, Mp - M), (0, Kp - K)))
    if (Kp, Np) != (K, N):
        b = jnp.pad(b, ((0, Kp - K), (0, Np - N)))
    bias_p = bias if Np == N else jnp.pad(bias, (0, Np - N))
    bias_p = bias_p.reshape(1, Np)

    single_k = (Kp == tk)
    if single_k:
        grid = (Mp // tm, Np // tn)
        grid_spec = pltpu.PrefetchScalarGridSpec(
            num_scalar_prefetch=0,
            grid=grid,
            in_specs=[
                pl.BlockSpec((tm, tk), lambda i, j: (i, 0)),
                pl.BlockSpec((tk, tn), lambda i, j: (0, j)),
                pl.BlockSpec((1, tn), lambda i, j: (0, j)),
            ],
            out_specs=pl.BlockSpec((tm, tn), lambda i, j: (i, j)),
        )
        kernel = functools.partial(_mm_kernel_single, relu=relu)
        dims = ("parallel", "parallel")
    else:
        grid = (Mp // tm, Np // tn, Kp // tk)
        grid_spec = pltpu.PrefetchScalarGridSpec(
            num_scalar_prefetch=0,
            grid=grid,
            in_specs=[
                pl.BlockSpec((tm, tk), lambda i, j, k: (i, k)),
                pl.BlockSpec((tk, tn), lambda i, j, k: (k, j)),
                pl.BlockSpec((1, tn), lambda i, j, k: (0, j)),
            ],
            out_specs=pl.BlockSpec((tm, tn), lambda i, j, k: (i, j)),
            scratch_shapes=[pltpu.VMEM((tm, tn), jnp.float32)],
        )
        kernel = functools.partial(_mm_kernel_multi, relu=relu)
        dims = ("parallel", "parallel", "arbitrary")

    out = pl.pallas_call(
        kernel,
        out_shape=jax.ShapeDtypeStruct((Mp, Np), out_dtype),
        grid_spec=grid_spec,
        compiler_params=pltpu.CompilerParams(
            dimension_semantics=dims, vmem_limit_bytes=_VMEM_LIMIT),
    )(a, b, bias_p)
    if (Mp, Np) != (M, N):
        out = out[:M, :N]
    return out


# ----------------------------------------------------------------------------
# Pallas attention kernel (bf16 inputs, f32 softmax, EUP reciprocal)
# ----------------------------------------------------------------------------
def _attn_kernel(q_ref, k_ref, v_ref, o_ref, *, scale):
    q = q_ref[0]                                     # (Nq, Dh) bf16
    k = k_ref[0]                                     # (Nk, Dh) bf16
    v = v_ref[0]                                     # (Nk, Dh) bf16
    s = lax.dot_general(q, k, (((1,), (1,)), ((), ())),
                        preferred_element_type=jnp.float32) * scale
    m = jnp.max(s, axis=-1, keepdims=True)
    p = jnp.exp(s - m)
    l = jnp.sum(p, axis=-1, keepdims=True)
    p = p * pl.reciprocal(l, approx=True)
    o = jnp.dot(p.astype(v.dtype), v, preferred_element_type=jnp.float32)
    o_ref[0] = o.astype(o_ref.dtype)


def pallas_attention(q, k, v, heads):
    """q: (B, Nq, C); k, v: (B, Nk, C) with C = heads*Dh -> (B, Nq, C).

    One grid step per (image, head); head axis marked parallel (v7x 2x TC).
    """
    B, Nq, C = q.shape
    Nk = k.shape[1]
    Dh = C // heads
    scale = 1.0 / math.sqrt(Dh)

    if heads == 1:
        qh, kh, vh = q, k, v
    else:
        def split(t, n):
            return (t.reshape(B, n, heads, Dh)
                     .transpose(0, 2, 1, 3).reshape(B * heads, n, Dh))
        qh, kh, vh = split(q, Nq), split(k, Nk), split(v, Nk)

    o = pl.pallas_call(
        functools.partial(_attn_kernel, scale=scale),
        out_shape=jax.ShapeDtypeStruct((B * heads, Nq, Dh), jnp.bfloat16),
        grid_spec=pltpu.PrefetchScalarGridSpec(
            num_scalar_prefetch=0,
            grid=(B * heads,),
            in_specs=[
                pl.BlockSpec((1, Nq, Dh), lambda g: (g, 0, 0)),
                pl.BlockSpec((1, Nk, Dh), lambda g: (g, 0, 0)),
                pl.BlockSpec((1, Nk, Dh), lambda g: (g, 0, 0)),
            ],
            out_specs=pl.BlockSpec((1, Nq, Dh), lambda g: (g, 0, 0)),
        ),
        compiler_params=pltpu.CompilerParams(
            dimension_semantics=("parallel",)),
    )(qh, kh, vh)

    if heads == 1:
        return o
    return (o.reshape(B, heads, Nq, Dh)
             .transpose(0, 2, 1, 3).reshape(B, Nq, C))


# ----------------------------------------------------------------------------
# Plain-JAX glue (NHWC im2col, pooling, bilinear resize)
# ----------------------------------------------------------------------------
def conv2d(x, p, stride=1, padding=0, dilation=1, relu=False):
    """x: (N, H, W, C) NHWC; weight stored GEMM-ready as (kh*kw*Cin, Cout) bf16."""
    w, b, k = p["w"], p["b"], p["k"]
    N, H, W, Cin = x.shape
    Cout = w.shape[1]
    xp = jnp.pad(x, ((0, 0), (padding, padding), (padding, padding), (0, 0)))
    Hp, Wp = xp.shape[1], xp.shape[2]
    OH = (Hp - dilation * (k - 1) - 1) // stride + 1
    OW = (Wp - dilation * (k - 1) - 1) // stride + 1
    cols = []
    for i in range(k):
        for j in range(k):
            hi, wi = i * dilation, j * dilation
            cols.append(xp[:, hi:hi + stride * (OH - 1) + 1:stride,
                           wi:wi + stride * (OW - 1) + 1:stride, :])
    col = jnp.stack(cols, axis=3)                     # (N, OH, OW, kh*kw, Cin)
    col = col.reshape(N * OH * OW, k * k * Cin)
    out = pallas_matmul(col, w, bias=b, relu=relu)
    return out.reshape(N, OH, OW, Cout)


def maxpool2(x):
    N, H, W, C = x.shape
    return x.reshape(N, H // 2, 2, W // 2, 2, C).max(axis=(2, 4))


def avgpool2(x):
    N, H, W, C = x.shape
    return x.reshape(N, H // 2, 2, W // 2, 2, C).mean(axis=(2, 4))


def resize_bilinear(x, oh, ow):
    """F.interpolate(..., mode='bilinear', align_corners=True), NHWC."""
    N, H, W, C = x.shape

    def coords(out, inn):
        if out == 1 or inn == 1:
            return jnp.zeros((out,), jnp.float32)
        return jnp.arange(out, dtype=jnp.float32) * ((inn - 1) / (out - 1))

    ys, xs = coords(oh, H), coords(ow, W)
    y0 = jnp.floor(ys).astype(jnp.int32)
    y1 = jnp.minimum(y0 + 1, H - 1)
    x0 = jnp.floor(xs).astype(jnp.int32)
    x1 = jnp.minimum(x0 + 1, W - 1)
    wy = (ys - y0.astype(jnp.float32)).reshape(1, oh, 1, 1)
    wx = (xs - x0.astype(jnp.float32)).reshape(1, 1, ow, 1)
    g = lambda yi, xi: x[:, yi, :, :][:, :, xi, :]
    top = g(y0, x0) * (1 - wx) + g(y0, x1) * wx
    bot = g(y1, x0) * (1 - wx) + g(y1, x1) * wx
    return top * (1 - wy) + bot * wy


# ----------------------------------------------------------------------------
# Attention-based interaction modules (fused QKV, batched launches)
# ----------------------------------------------------------------------------
def mha(p, xq, xkv, h):
    """Multi-head attention, NHWC in/out.  QKV fused into one (C,3C) GEMM when
    query and key/value source are the same tensor, otherwise Q + fused KV."""
    B, H, W, C = xq.shape
    _, Hk, Wk, _ = xkv.shape
    Nq, Nk = H * W, Hk * Wk
    w_qkv, b_qkv = p["qkv"]["w"], p["qkv"]["b"]
    tq = xq.reshape(B * Nq, C)

    if xq is xkv:
        qkv = pallas_matmul(tq, w_qkv, b_qkv, out_dtype=jnp.bfloat16)
        q, k, v = qkv[:, :C], qkv[:, C:2 * C], qkv[:, 2 * C:]
    else:
        tkv = xkv.reshape(B * Nk, C)
        q = pallas_matmul(tq, w_qkv[:, :C], b_qkv[:C], out_dtype=jnp.bfloat16)
        kv = pallas_matmul(tkv, w_qkv[:, C:], b_qkv[C:], out_dtype=jnp.bfloat16)
        k, v = kv[:, :C], kv[:, C:]

    o = pallas_attention(q.reshape(B, Nq, C), k.reshape(B, Nk, C),
                         v.reshape(B, Nk, C), heads=h)
    o = pallas_matmul(o.reshape(B * Nq, C), p["o"]["w"], p["o"]["b"])
    return o.reshape(B, H, W, C)


def rt_module(p, a, b, h, redunction=False):
    # TODO(synk): RTModule source unavailable; modeled as bidirectional multi-head
    # cross-attention (exact ST / redunction semantics unknown; redunction -> pooled K/V).
    b_kv = avgpool2(b) if redunction else b
    a_kv = avgpool2(a) if redunction else a
    return mha(p["ab"], a, b_kv, h), mha(p["ba"], b, a_kv, h)


def self_module(p, x, h, redunction=False):
    # TODO(synk): SelfModule source unavailable; modeled as multi-head self-attention.
    kv = avgpool2(x) if redunction else x
    return mha(p, x, kv, h)


def stafm(p, s, t, h):
    # TODO(synk): STAFM source unavailable; modeled as cross-attention fusion + residual.
    return s + mha(p, s, t, h)


# ----------------------------------------------------------------------------
# Parameter initialization (deterministic, GEMM-ready bf16 weights)
# ----------------------------------------------------------------------------
class _Rng:
    def __init__(self, seed=0):
        self.key = jax.random.PRNGKey(seed)

    def take(self):
        self.key, sub = jax.random.split(self.key)
        return sub


def dense_p(rng, cin, cout):
    s = 1.0 / math.sqrt(cin)
    w = jax.random.uniform(rng.take(), (cin, cout), jnp.float32, -s, s)
    return {"w": w.astype(jnp.bfloat16), "b": jnp.zeros((cout,), jnp.float32)}


def conv_p(rng, cin, cout, k):
    s = 1.0 / math.sqrt(cin * k * k)
    w = jax.random.uniform(rng.take(), (k * k * cin, cout), jnp.float32, -s, s)
    return {"w": w.astype(jnp.bfloat16), "b": jnp.zeros((cout,), jnp.float32),
            "k": k}


def mha_p(rng, c):
    return {"qkv": dense_p(rng, c, 3 * c), "o": dense_p(rng, c, c)}


def rt_p(rng, c):
    return {"ab": mha_p(rng, c), "ba": mha_p(rng, c)}


_DIL_CH = 128  # TODO(synk): dilation-branch width of Spatial/Temporal is unknown.


def backbone_p(rng, in_ch):
    # TODO(synk): ResNet34 backbone details (BN, residual blocks) not provided;
    # modeled as conv+ReLU stages with matching channel/stride plan.
    return {
        "inconv": conv_p(rng, in_ch, 64, 7),
        "enc1": conv_p(rng, 64, 64, 3),
        "enc2": conv_p(rng, 64, 128, 3),
        "enc3": conv_p(rng, 128, 256, 3),
        "enc4": conv_p(rng, 256, 512, 3),
        "dil": [conv_p(rng, 512, _DIL_CH, 3) for _ in range(4)],
        "dec4": conv_p(rng, 512 + 4 * _DIL_CH, 256, 3),
        "dec3": conv_p(rng, 256 + 256, 128, 3),
        "dec2": conv_p(rng, 128 + 128, 64, 3),
        "dec1": conv_p(rng, 64 + 64, 32, 3),
        "out4": conv_p(rng, 256, 1, 3),
        "out3": conv_p(rng, 128, 1, 3),
        "out2": conv_p(rng, 64, 1, 3),
        "out1": conv_p(rng, 32, 1, 3),
    }


def init_params(seed=0):
    rng = _Rng(seed)
    chans = [64, 128, 256, 512]
    return {
        "spatial": backbone_p(rng, 3),
        "temporal": backbone_p(rng, 6),
        "SS": [rt_p(rng, c) for c in chans],
        "ST": [rt_p(rng, c) for c in chans],
        "TT": [rt_p(rng, c) for c in chans],
        "Sself": [mha_p(rng, c) for c in chans],
        "Tself": [mha_p(rng, c) for c in chans],
        "stafm": [mha_p(rng, 64), mha_p(rng, 128), mha_p(rng, 256)],
        "heads": [1, 2, 4, 8],
    }


# ----------------------------------------------------------------------------
# Interactive forward (NHWC activations)
# ----------------------------------------------------------------------------
def _interact(p, lvl, spat, temp, B, Seq):
    h = p["heads"][lvl]
    red = (lvl == 0)
    _, H, W, C = spat.shape
    s = spat.reshape(B, Seq, H, W, C)
    t = temp.reshape(B, Seq, H, W, C)
    s1, s2 = s[:, 0], s[:, 1]
    t1, t2 = t[:, 0], t[:, 1]

    # Distinct-weight pairs.
    S1S, S2S = rt_module(p["SS"][lvl], s1, s2, h, red)
    T1T, T2T = rt_module(p["TT"][lvl], t1, t2, h, red)

    # Shared-weight branches: batch both frames into one launch each.
    s12 = jnp.concatenate([s1, s2], 0)
    t12 = jnp.concatenate([t1, t2], 0)
    Sself = self_module(p["Sself"][lvl], s12, h, red)
    Tself = self_module(p["Tself"][lvl], t12, h, red)
    ST, TS = rt_module(p["ST"][lvl], s12, t12, h, red)

    S1self, S2self = Sself[:B], Sself[B:]
    T1self, T2self = Tself[:B], Tself[B:]
    S1T, S2T = ST[:B], ST[B:]
    T1S, T2S = TS[:B], TS[B:]

    S1 = S1S + S1self + S1T + s1
    S2 = S2S + S2self + S2T + s2
    T1 = T1S + T1self + T1T + t1
    T2 = T2S + T2self + T2T + t2
    return jnp.concatenate([S1, S2], 0), jnp.concatenate([T1, T2], 0)


def encoder(p, img, flow):
    B, Seq, C, H, W = img.shape
    sp, tp = p["spatial"], p["temporal"]

    x_s = img.reshape(B * Seq, C, H, W).transpose(0, 2, 3, 1)       # NHWC
    x_t = flow.reshape(B * Seq, 2 * C, H, W).transpose(0, 2, 3, 1)  # NHWC

    s0 = maxpool2(conv2d(x_s, sp["inconv"], stride=2, padding=3, relu=True))
    t0 = maxpool2(conv2d(x_t, tp["inconv"], stride=2, padding=3, relu=True))

    s1 = conv2d(s0, sp["enc1"], stride=1, padding=1, relu=True)
    t1 = conv2d(t0, tp["enc1"], stride=1, padding=1, relu=True)
    h1_s, h1_t = _interact(p, 0, s1, t1, B, Seq)

    s2 = conv2d(h1_s, sp["enc2"], stride=2, padding=1, relu=True)
    t2 = conv2d(h1_t, tp["enc2"], stride=2, padding=1, relu=True)
    h2_s, h2_t = _interact(p, 1, s2, t2, B, Seq)

    s3 = conv2d(h2_s, sp["enc3"], stride=2, padding=1, relu=True)
    t3 = conv2d(h2_t, tp["enc3"], stride=2, padding=1, relu=True)
    h3_s, h3_t = _interact(p, 2, s3, t3, B, Seq)

    s4 = conv2d(h3_s, sp["enc4"], stride=2, padding=1, relu=True)
    t4 = conv2d(h3_t, tp["enc4"], stride=2, padding=1, relu=True)
    h4_s, h4_t = _interact(p, 3, s4, t4, B, Seq)

    dil_s = [conv2d(h4_s, sp["dil"][i], stride=1, padding=2 ** (i + 1),
                    dilation=2 ** (i + 1), relu=True) for i in range(4)]
    dil_t = [conv2d(h4_t, tp["dil"][i], stride=1, padding=2 ** (i + 1),
                    dilation=2 ** (i + 1), relu=True) for i in range(4)]
    spatial5 = jnp.concatenate([h4_s] + dil_s, axis=-1)
    temporal5 = jnp.concatenate([h4_t] + dil_t, axis=-1)
    return spatial5, [h1_s, h2_s, h3_s], temporal5, [h1_t, h2_t, h3_t]


def _out_head(p_conv, feat, oh, ow):
    out = jax.nn.sigmoid(resize_bilinear(conv2d(feat, p_conv, 1, 1), oh, ow))
    return out.transpose(0, 3, 1, 2)          # back to NCHW at the interface


def spatial_decoder(p, x, spatial_f, temporal_f):
    sp = p["spatial"]
    f4 = conv2d(x, sp["dec4"], 1, 1, relu=True)
    H3, W3 = spatial_f[2].shape[1:3]
    fuse3 = stafm(p["stafm"][2], spatial_f[2], temporal_f[2], h=4)
    f3 = conv2d(jnp.concatenate([resize_bilinear(f4, H3, W3), fuse3], -1),
                sp["dec3"], 1, 1, relu=True)
    H2, W2 = spatial_f[1].shape[1:3]
    fuse2 = stafm(p["stafm"][1], spatial_f[1], temporal_f[1], h=2)
    f2 = conv2d(jnp.concatenate([resize_bilinear(f3, H2, W2), fuse2], -1),
                sp["dec2"], 1, 1, relu=True)
    H1, W1 = spatial_f[0].shape[1:3]
    fuse1 = stafm(p["stafm"][0], spatial_f[0], temporal_f[0], h=1)
    f1 = conv2d(jnp.concatenate([resize_bilinear(f2, H1, W1), fuse1], -1),
                sp["dec1"], 1, 1, relu=True)
    oh, ow = H1 * 4, W1 * 4
    return [_out_head(sp["out1"], f1, oh, ow), _out_head(sp["out2"], f2, oh, ow),
            _out_head(sp["out3"], f3, oh, ow), _out_head(sp["out4"], f4, oh, ow)]


def temporal_decoder(p, x, f):
    tp = p["temporal"]
    f4 = conv2d(x, tp["dec4"], 1, 1, relu=True)
    H3, W3 = f[2].shape[1:3]
    f3 = conv2d(jnp.concatenate([resize_bilinear(f4, H3, W3), f[2]], -1),
                tp["dec3"], 1, 1, relu=True)
    H2, W2 = f[1].shape[1:3]
    f2 = conv2d(jnp.concatenate([resize_bilinear(f3, H2, W2), f[1]], -1),
                tp["dec2"], 1, 1, relu=True)
    H1, W1 = f[0].shape[1:3]
    f1 = conv2d(jnp.concatenate([resize_bilinear(f2, H1, W1), f[0]], -1),
                tp["dec1"], 1, 1, relu=True)
    oh, ow = H1 * 4, W1 * 4
    return [_out_head(tp["out1"], f1, oh, ow), _out_head(tp["out2"], f2, oh, ow),
            _out_head(tp["out3"], f3, oh, ow), _out_head(tp["out4"], f4, oh, ow)]


def interactive_forward(p, img, flow, train_flow=True):
    spatial, s_feat, temporal, t_feat = encoder(p, img, flow)
    s_out = spatial_decoder(p, spatial, s_feat, t_feat)
    if train_flow:
        return s_out, temporal_decoder(p, temporal, t_feat)
    return s_out


# ----------------------------------------------------------------------------
if __name__ == "__main__":
    B, Seq, C, H, W = 1, 2, 3, 64, 64
    k_img, k_flow = jax.random.split(jax.random.PRNGKey(0))
    img = jax.random.normal(k_img, (B, Seq, C, H, W), jnp.float32)
    flow = jax.random.normal(k_flow, (B, Seq, 2 * C, H, W), jnp.float32)

    params = init_params(seed=0)
    s_outs, t_outs = interactive_forward(params, img, flow, train_flow=True)
    for o in s_outs + t_outs:
        jax.block_until_ready(o)
    assert all(o.shape == (B * Seq, 1, H, W) for o in s_outs + t_outs)
    print("KERNEL_OK")
</pallas_src>

<mosaic_0001>
module attributes {stable_mosaic.version = 11 : i64} {
  func.func @_mm_kernel_single(%arg0: i32, %arg1: i32, %arg2: memref<512x256xbf16, #tpu.memory_space<vmem>>, %arg3: memref<256x128xbf16, #tpu.memory_space<vmem>>, %arg4: memref<1x128xf32, #tpu.memory_space<vmem>>, %arg5: memref<512x128xf32, #tpu.memory_space<vmem>>) attributes {dimension_semantics = [#tpu.dimension_semantics<parallel>, #tpu.dimension_semantics<parallel>], iteration_bounds = array<i64: 4, 1>, scalar_prefetch = 0 : i64, scratch_operands = 0 : i64, tpu.core_type = #tpu.core_type<tc>, window_params = [{transform_indices = @transform_0, window_bounds = array<i64: 512, 256>}, {transform_indices = @transform_1, window_bounds = array<i64: 256, 128>}, {transform_indices = @transform_2, window_bounds = array<i64: 1, 128>}, {transform_indices = @transform_3, window_bounds = array<i64: 512, 128>}]} {
    %c0 = arith.constant 0 : index
    %c0_0 = arith.constant 0 : index
    %0 = vector.load %arg2[%c0, %c0_0] : memref<512x256xbf16, #tpu.memory_space<vmem>>, vector<512x256xbf16>
    %c0_1 = arith.constant 0 : index
    %c0_2 = arith.constant 0 : index
    %1 = vector.load %arg3[%c0_1, %c0_2] : memref<256x128xbf16, #tpu.memory_space<vmem>>, vector<256x128xbf16>
    %cst = arith.constant dense<0.000000e+00> : vector<512x128xf32>
    %2 = tpu.matmul %0, %1, %cst {dimension_numbers = #tpu.dot_dimension_numbers<[1], [0], [0], [1], [0, 0, 1, 1], [], []>} : vector<512x256xbf16>, vector<256x128xbf16>, vector<512x128xf32> -> vector<512x128xf32>
    %c0_3 = arith.constant 0 : index
    %c0_4 = arith.constant 0 : index
    %3 = vector.load %arg4[%c0_3, %c0_4] : memref<1x128xf32, #tpu.memory_space<vmem>>, vector<1x128xf32>
    %4 = vector.broadcast %3 : vector<1x128xf32> to vector<512x128xf32>
    %5 = arith.addf %2, %4 : vector<512x128xf32>
    %cst_5 = arith.constant 0.000000e+00 : f32
    %6 = vector.broadcast %cst_5 : f32 to vector<512x128xf32>
    %7 = arith.maximumf %5, %6 : vector<512x128xf32>
    %c0_6 = arith.constant 0 : index
    %c0_7 = arith.constant 0 : index
    %8 = vector.load %arg5[%c0_6, %c0_7] : memref<512x128xf32, #tpu.memory_space<vmem>>, vector<512x128xf32>
    tpu.vector_store %arg5[%c0_6, %c0_7], %7 {strides = array<i32>} : memref<512x128xf32, #tpu.memory_space<vmem>>, vector<512x128xf32>,
    return
  }
  func.func @transform_0(%arg0: i32, %arg1: i32) -> (i32, i32) {
    %c0_i32 = arith.constant 0 : i32
    %c0_i32_0 = arith.constant 0 : i32
    return %arg0, %c0_i32 : i32, i32
  }
  func.func @transform_1(%arg0: i32, %arg1: i32) -> (i32, i32) {
    %c0_i32 = arith.constant 0 : i32
    %c0_i32_0 = arith.constant 0 : i32
    return %c0_i32, %arg1 : i32, i32
  }
  func.func @transform_2(%arg0: i32, %arg1: i32) -> (i32, i32) {
    %c0_i32 = arith.constant 0 : i32
    %c0_i32_0 = arith.constant 0 : i32
    return %c0_i32, %arg1 : i32, i32
  }
  func.func @transform_3(%arg0: i32, %arg1: i32) -> (i32, i32) {
    %c0_i32 = arith.constant 0 : i32
    return %arg0, %arg1 : i32, i32
  }
}

</mosaic_0001>

<llo_original>
// kernel: tpu_custom_call.1
$region0: #{tpu_custom_call.1}
  #allocation0 [shape = 'u32[]', space=smem, size = 0x4, offset = 0x4, fixed_abs, tag = 'smem constant byte address 0x4 - core index']
  #allocation1 [shape = 'u32[144,128]{1,0:T(1,128)}', space=vmem, size = 0x12000, scoped, tag = 'internal scratch']
  %s0 = inlined_call_operand.hbm [shape: bf16[2048,256], index: 0, kind: input, shape index: {}]
  %s1 = inlined_call_operand.hbm [shape: bf16[256,128], index: 1, kind: input, shape index: {}]
  %s2 = inlined_call_operand.vmem [shape: f32[1,128], index: 2, kind: input, shape index: {}]
  %s3 = inlined_call_operand.hbm [shape: f32[2048,128], index: 3, kind: output, shape index: {}]
  %s4 = sld [smem:[#allocation0]]
  $region53: #{tpu_custom_call.1} parent=0
    _
  %s6 = ssub.s32 1, %s4
  %s7 = scalar_select 0, %s6, %s4
  $region1: #{tpu_custom_call.1} parent=0
    #allocation2 [shape = 'u8[524288]{0}', space=vmem, size = 0x80000, scoped, tag = 'input window, operand 0']
    #allocation3 [shape = 's32[2]{0}', space=sflag, size = 0x8, scoped, tag = 'scoped memory for tpu_custom_call.1']
    #allocation4 [shape = 's32[2]{0}', space=sflag, size = 0x8, scoped, tag = 'scoped memory for tpu_custom_call.1']
    #allocation5 [shape = 'u8[65536]{0}', space=vmem, size = 0x10000, scoped, tag = 'input window, operand 1, single buffered']
    #allocation6 [shape = 's32[1]{0}', space=sflag, size = 0x4, scoped, tag = 'scoped memory for tpu_custom_call.1']
    #allocation7 [shape = 'u8[524288]{0}', space=vmem, size = 0x80000, scoped, tag = 'output window, operand 0']
    %8 = vsyncpa [#allocation3], 0
    %s9 = scalar_lea.sflag [#allocation3], 1
    %10 = vsyncpa %s9, 0
    %11 = vsyncpa [#allocation6], 0
    %12 = vsyncpa [#allocation4], 0
    %s13 = scalar_lea.sflag [#allocation4], 1
    %14 = vsyncpa %s13, 0
    loop: start=0, step=1, limit=6
    $region2: #{tpu_custom_call.1} parent=1 // loop_pre_header
      _
    $region3: #{tpu_custom_call.1} parent=1 // loop_header
      %s16 = sphi 0, %s20
      %p17 = scmp.ge.s32.totalorder %s16, 6
      %s23 = sphi 0, %s35
      %s24 = sphi 0, %s31
      %s25 = sphi 0, %s23
      %s26 = sphi 0, %s24
      %s27 = sphi 0, %s25
      %s28 = sphi 0, %s26
      %s38 = sphi 0, %s40
      %s41 = sphi 0, %s38
      %s42 = sphi 0, %s41
      %s58 = sphi 0, %s42
      %s64 = sphi 0, %s66
      %s67 = sphi 0, %s64
      %s68 = sphi 0, %s67
      %s84 = sphi 0, %s68
      %s90 = sphi 0, %s92
      %s93 = sphi 0, %s90
      %s94 = sphi 0, %s93
      %s110 = sphi 0, %s94
      %s118 = sphi 0, %s120
      %s121 = sphi 0, %s118
      %s122 = sphi 0, %s121
      %s138 = sphi 0, %s122
    $region4: #{tpu_custom_call.1} parent=1 // loop_header_branch
      %19 = sbr.rel (%p17) target = $region8
    $region5: #{tpu_custom_call.1} parent=1 // loop_body
      %s21 = ssub.s32 %s16, 1
      %s22 = ssub.s32 %s16, 2
      %s29 = sadd.s32 1, %s24
      %p30 = scmp.ge.s32.totalorder %s29, 1
      %s31 = scalar_select %p30, 0, %s29
      %s32 = sadd.s32 1, %s23
      %s33 = scalar_select %p30, %s32, %s23
      %p34 = scmp.ge.s32.totalorder %s33, 4
      %s35 = scalar_select %p34, 0, %s33
      %s36 = ssub.s32 %s23, %s35
      %p37 = scmp.eq.s32.totalorder %s36, 0
      %s39 = sadd.s32 %s38, 1
      %s40 = scalar_select %p37, %s38, %s39
      %p43 = pneg %p37
      %p44 = scmp.eq.s32.totalorder %s16, 3
      %p45 = por %p43, %p44
      %p46 = scmp.ne.s32.totalorder %s38, %s41
      %p47 = scmp.eq.s32.totalorder %s16, 0
      %p48 = por %p46, %p47
      %p49 = scmp.ne.s32.totalorder %s38, %s41
      %p50 = scmp.eq.s32.totalorder %s21, 3
      %p51 = por %p49, %p50
      %p52 = scmp.ne.s32.totalorder %s41, %s42
      %p53 = scmp.eq.s32.totalorder %s21, 0
      %p54 = por %p52, %p53
      %p55 = scmp.ne.s32.totalorder %s41, %s42
      %p56 = scmp.eq.s32.totalorder %s22, 3
      %p57 = por %p55, %p56
      %p59 = scmp.ne.s32.totalorder %s42, %s58
      %p60 = scmp.eq.s32.totalorder %s22, 0
      %p61 = por %p59, %p60
      %s62 = ssub.s32 %s24, %s31
      %p63 = scmp.eq.s32.totalorder %s62, 0
      %s65 = sadd.s32 %s64, 1
      %s66 = scalar_select %p63, %s64, %s65
      %p69 = pneg %p63
      %p70 = scmp.eq.s32.totalorder %s16, 3
      %p71 = por %p69, %p70
      %p72 = scmp.ne.s32.totalorder %s64, %s67
      %p73 = scmp.eq.s32.totalorder %s16, 0
      %p74 = por %p72, %p73
      %p75 = scmp.ne.s32.totalorder %s64, %s67
      %p76 = scmp.eq.s32.totalorder %s21, 3
      %p77 = por %p75, %p76
      %p78 = scmp.ne.s32.totalorder %s67, %s68
      %p79 = scmp.eq.s32.totalorder %s21, 0
      %p80 = por %p78, %p79
      %p81 = scmp.ne.s32.totalorder %s67, %s68
      %p82 = scmp.eq.s32.totalorder %s22, 3
      %p83 = por %p81, %p82
      %p85 = scmp.ne.s32.totalorder %s68, %s84
      %p86 = scmp.eq.s32.totalorder %s22, 0
      %p87 = por %p85, %p86
      %s88 = ssub.s32 %s24, %s31
      %p89 = scmp.eq.s32.totalorder %s88, 0
      %s91 = sadd.s32 %s90, 1
      %s92 = scalar_select %p89, %s90, %s91
      %p95 = pneg %p89
      %p96 = scmp.eq.s32.totalorder %s16, 3
      %p97 = por %p95, %p96
      %p98 = scmp.ne.s32.totalorder %s90, %s93
      %p99 = scmp.eq.s32.totalorder %s16, 0
      %p100 = por %p98, %p99
      %p101 = scmp.ne.s32.totalorder %s90, %s93
      %p102 = scmp.eq.s32.totalorder %s21, 3
      %p103 = por %p101, %p102
      %p104 = scmp.ne.s32.totalorder %s93, %s94
      %p105 = scmp.eq.s32.totalorder %s21, 0
      %p106 = por %p104, %p105
      %p107 = scmp.ne.s32.totalorder %s93, %s94
      %p108 = scmp.eq.s32.totalorder %s22, 3
      %p109 = por %p107, %p108
      %p111 = scmp.ne.s32.totalorder %s94, %s110
      %p112 = scmp.eq.s32.totalorder %s22, 0
      %p113 = por %p111, %p112
      %s114 = ssub.s32 %s23, %s35
      %s115 = ssub.s32 %s24, %s31
      %s116 = sor.u32 %s114, %s115
      %p117 = scmp.eq.s32.totalorder %s116, 0
      %s119 = sadd.s32 %s118, 1
      %s120 = scalar_select %p117, %s118, %s119
      %p123 = pneg %p117
      %p124 = scmp.eq.s32.totalorder %s16, 3
      %p125 = por %p123, %p124
      %p126 = scmp.ne.s32.totalorder %s118, %s121
      %p127 = scmp.eq.s32.totalorder %s16, 0
      %p128 = por %p126, %p127
      %p129 = scmp.ne.s32.totalorder %s118, %s121
      %p130 = scmp.eq.s32.totalorder %s21, 3
      %p131 = por %p129, %p130
      %p132 = scmp.ne.s32.totalorder %s121, %s122
      %p133 = scmp.eq.s32.totalorder %s21, 0
      %p134 = por %p132, %p133
      %p135 = scmp.ne.s32.totalorder %s121, %s122
      %p136 = scmp.eq.s32.totalorder %s22, 3
      %p137 = por %p135, %p136
      %p139 = scmp.ne.s32.totalorder %s122, %s138
      %p140 = scmp.eq.s32.totalorder %s22, 0
      %p141 = por %p139, %p140
      %p142 = scmp.le.s32.totalorder 1, %s16
      %p143 = scmp.lt.s32.totalorder %s16, 5
      %p144 = pnand %p142, %p143
      %p145 = pneg %p144
      // Predicated region
      $region9: #{tpu_custom_call.1} parent=5 // pred_check
        _
      $region10: #{tpu_custom_call.1} parent=5 // pred_check_branch
        %147 = sbr.rel (%p144) target = $region12
      $region11: #{tpu_custom_call.1} parent=5 // pred_region
        %s148 = ssub.s32 %s16, 1
        // Predicated region
        $region13: #{tpu_custom_call.1} parent=11 // pred_check
          %p149 = pneg %p80
        $region14: #{tpu_custom_call.1} parent=11 // pred_check_branch
          %151 = sbr.rel (%p149) target = $region16
        $region15: #{tpu_custom_call.1} parent=11 // pred_region
          %s153 = ssub.s32 2048, 2048
          %154 = vsyncadd [#allocation6], %s153
          %s155 = smul.addr %s26, 64
          %s156 = scalar_lea.hbm %s1, %s155
          %s157 = sshll.u32 [#allocation5], 4
          %s158 = int_to_ptr.vmem [resolvable:$true] %s157
          %163 = dma.hbm_to_vmem [thread:$0]  %s156, 2048, %s158, [#allocation6], 64, 64, 4
        $region16: #{tpu_custom_call.1} parent=11 // pred_fallthru
          _
        // Predicated region
        $region17: #{tpu_custom_call.1} parent=11 // pred_check
          %p164 = pneg %p106
        $region18: #{tpu_custom_call.1} parent=11 // pred_check_branch
          %166 = sbr.rel (%p164) target = $region20
        $region19: #{tpu_custom_call.1} parent=11 // pred_region
          %p167 = scmp.lt.s32.totalorder %s26, 0
          %s168 = scalar_select %p167, %s26, 0
          %s169 = scalar_lea.vmem %s2, %s168
        $region20: #{tpu_custom_call.1} parent=11 // pred_fallthru
          _
      $region12: #{tpu_custom_call.1} parent=5 // pred_fallthru
        _
      %p170 = scmp.lt.s32.totalorder %s16, 4
      // Predicated region
      $region21: #{tpu_custom_call.1} parent=5 // pred_check
        %p171 = pneg %p170
      $region22: #{tpu_custom_call.1} parent=5 // pred_check_branch
        %173 = sbr.rel (%p171) target = $region24
      $region23: #{tpu_custom_call.1} parent=5 // pred_region
        // Predicated region
        $region25: #{tpu_custom_call.1} parent=23 // pred_check
          %p174 = pneg %p48
        $region26: #{tpu_custom_call.1} parent=23 // pred_check_branch
          %176 = sbr.rel (%p174) target = $region28
        $region27: #{tpu_custom_call.1} parent=23 // pred_region
          %s177 = sand.u32 %s38, 1
          %s178 = scalar_lea.sflag [#allocation3], %s177
          %s179 = sand.u32 %s38, 1
          %s180 = smul.addr %s179, 512
          %s181 = scalar_lea.vmem [#allocation2], %s180
          %s182 = smul.u32 64, %s23
          %s184 = ssub.s32 8192, 8192
          %185 = vsyncadd %s178, %s184
          %s186 = smul.addr %s182, 2
          %s187 = smul.addr %s186, 64
          %s188 = scalar_lea.hbm %s0, %s187
          %s189 = sshll.u32 %s181, 4
          %s190 = int_to_ptr.vmem [resolvable:$true] %s189
          %195 = dma.hbm_to_vmem [thread:$0]  %s188, 8192, %s190, %s178, 128, 128, 8
        $region28: #{tpu_custom_call.1} parent=23 // pred_fallthru
          _
      $region24: #{tpu_custom_call.1} parent=5 // pred_fallthru
        _
      %p196 = scmp.le.s32.totalorder 1, %s16
      %p197 = scmp.lt.s32.totalorder %s16, 5
      %p198 = pnand %p196, %p197
      %p199 = pneg %p198
      // Predicated region
      $region29: #{tpu_custom_call.1} parent=5 // pred_check
        _
      $region30: #{tpu_custom_call.1} parent=5 // pred_check_branch
        %201 = sbr.rel (%p198) target = $region32
      $region31: #{tpu_custom_call.1} parent=5 // pred_region
        %s202 = ssub.s32 %s16, 1
        %s203 = sand.u32 %s41, 1
        %s204 = scalar_lea.sflag [#allocation3], %s203
        %s205 = sand.u32 %s41, 1
        %s206 = smul.addr %s205, 512
        %s207 = scalar_lea.vmem [#allocation2], %s206
        // Predicated region
        $region33: #{tpu_custom_call.1} parent=31 // pred_check
          %p208 = pneg %p54
        $region34: #{tpu_custom_call.1} parent=31 // pred_check_branch
          %210 = sbr.rel (%p208) target = $region36
        $region35: #{tpu_custom_call.1} parent=31 // pred_region
          %211 = dma.done %s204, 8192
        $region36: #{tpu_custom_call.1} parent=31 // pred_fallthru
          _
        // Predicated region
        $region37: #{tpu_custom_call.1} parent=31 // pred_check
          %p212 = pneg %p80
        $region38: #{tpu_custom_call.1} parent=31 // pred_check_branch
          %214 = sbr.rel (%p212) target = $region40
        $region39: #{tpu_custom_call.1} parent=31 // pred_region
          %215 = dma.done [#allocation6], 2048
        $region40: #{tpu_custom_call.1} parent=31 // pred_fallthru
          _
        %s216 = sand.u32 %s41, 1
        %s217 = scalar_lea.sflag [#allocation3], %s216
        %s218 = sand.u32 %s41, 1
        %s219 = smul.addr %s218, 512
        %s220 = scalar_lea.vmem [#allocation2], %s219
        %p221 = pneg %p54
        %p222 = pneg %p51
        %p223 = pneg %p80
        %p224 = pneg %p77
        %p225 = scmp.lt.s32.totalorder %s26, 0
        %s226 = scalar_select %p225, %s26, 0
        %s227 = scalar_lea.vmem %s2, %s226
        %p228 = pneg %p106
        %p229 = pneg %p103
        %p230 = pneg %p134
        %p231 = pneg %p131
        %s232 = sand.u32 %s121, 1
        %s233 = scalar_lea.sflag [#allocation4], %s232
        %s234 = sand.u32 %s121, 1
        %s235 = smul.addr %s234, 512
        %s236 = scalar_lea.vmem [#allocation7], %s235
        %s237 = smul.u32 64, %s25
        %p238 = scmp.lt.s32.totalorder %s26, 0
        %s239 = scalar_select %p238, %s26, 0
        %s240 = scalar_lea.vmem %s2, %s239
        %s241 = smul.u32 64, %s25
        %v243 = vld [vmem:[%s207] sm:$0xff]
        %v244 = vld [vmem:[%s207 + $0x8] sm:$0xff]
        %v245 = vld [vmem:[%s207 + $0x10] sm:$0xff]
        %v246 = vld [vmem:[%s207 + $0x18] sm:$0xff]
        %v247 = vld [vmem:[%s207 + $0x20] sm:$0xff]
        %v248 = vld [vmem:[%s207 + $0x28] sm:$0xff]
        %v249 = vld [vmem:[%s207 + $0x30] sm:$0xff]
        %v250 = vld [vmem:[%s207 + $0x38] sm:$0xff]
        %v251 = vld [vmem:[%s207 + $0x40] sm:$0xff]
        %v252 = vld [vmem:[%s207 + $0x48] sm:$0xff]
        %v253 = vld [vmem:[%s207 + $0x50] sm:$0xff]
        %v254 = vld [vmem:[%s207 + $0x58] sm:$0xff]
        %v255 = vld [vmem:[%s207 + $0x60] sm:$0xff]
        %v256 = vld [vmem:[%s207 + $0x68] sm:$0xff]
        %v257 = vld [vmem:[%s207 + $0x70] sm:$0xff]
        %v258 = vld [vmem:[%s207 + $0x78] sm:$0xff]
        %v259 = vld [vmem:[%s207 + $0x80] sm:$0xff]
        %v260 = vld [vmem:[%s207 + $0x88] sm:$0xff]
        %v261 = vld [vmem:[%s207 + $0x90] sm:$0xff]
        %v262 = vld [vmem:[%s207 + $0x98] sm:$0xff]
        %v263 = vld [vmem:[%s207 + $0xa0] sm:$0xff]
        %v264 = vld [vmem:[%s207 + $0xa8] sm:$0xff]
        %v265 = vld [vmem:[%s207 + $0xb0] sm:$0xff]
        %v266 = vld [vmem:[%s207 + $0xb8] sm:$0xff]
        %v267 = vld [vmem:[%s207 + $0xc0] sm:$0xff]
        %v268 = vld [vmem:[%s207 + $0xc8] sm:$0xff]
        %v269 = vld [vmem:[%s207 + $0xd0] sm:$0xff]
        %v270 = vld [vmem:[%s207 + $0xd8] sm:$0xff]
        %v271 = vld [vmem:[%s207 + $0xe0] sm:$0xff]
        %v272 = vld [vmem:[%s207 + $0xe8] sm:$0xff]
        %v273 = vld [vmem:[%s207 + $0xf0] sm:$0xff]
        %v274 = vld [vmem:[%s207 + $0xf8] sm:$0xff]
        %v275 = vld [vmem:[%s207 + $0x100] sm:$0xff]
        %v276 = vld [vmem:[%s207 + $0x108] sm:$0xff]
        %v277 = vld [vmem:[%s207 + $0x110] sm:$0xff]
        %v278 = vld [vmem:[%s207 + $0x118] sm:$0xff]
        %v279 = vld [vmem:[%s207 + $0x120] sm:$0xff]
        %v280 = vld [vmem:[%s207 + $0x128] sm:$0xff]
        %v281 = vld [vmem:[%s207 + $0x130] sm:$0xff]
        %v282 = vld [vmem:[%s207 + $0x138] sm:$0xff]
        %v283 = vld [vmem:[%s207 + $0x140] sm:$0xff]
        %v284 = vld [vmem:[%s207 + $0x148] sm:$0xff]
        %v285 = vld [vmem:[%s207 + $0x150] sm:$0xff]
        %v286 = vld [vmem:[%s207 + $0x158] sm:$0xff]
        %v287 = vld [vmem:[%s207 + $0x160] sm:$0xff]
        %v288 = vld [vmem:[%s207 + $0x168] sm:$0xff]
        %v289 = vld [vmem:[%s207 + $0x170] sm:$0xff]
        %v290 = vld [vmem:[%s207 + $0x178] sm:$0xff]
        %v291 = vld [vmem:[%s207 + $0x180] sm:$0xff]
        %v292 = vld [vmem:[%s207 + $0x188] sm:$0xff]
        %v293 = vld [vmem:[%s207 + $0x190] sm:$0xff]
        %v294 = vld [vmem:[%s207 + $0x198] sm:$0xff]
        %v295 = vld [vmem:[%s207 + $0x1a0] sm:$0xff]
        %v296 = vld [vmem:[%s207 + $0x1a8] sm:$0xff]
        %v297 = vld [vmem:[%s207 + $0x1b0] sm:$0xff]
        %v298 = vld [vmem:[%s207 + $0x1b8] sm:$0xff]
        %v299 = vld [vmem:[%s207 + $0x1c0] sm:$0xff]
        %v300 = vld [vmem:[%s207 + $0x1c8] sm:$0xff]
        %v301 = vld [vmem:[%s207 + $0x1d0] sm:$0xff]
        %v302 = vld [vmem:[%s207 + $0x1d8] sm:$0xff]
        %v303 = vld [vmem:[%s207 + $0x1e0] sm:$0xff]
        %v304 = vld [vmem:[%s207 + $0x1e8] sm:$0xff]
        %v305 = vld [vmem:[%s207 + $0x1f0] sm:$0xff]
        %v306 = vld [vmem:[%s207 + $0x1f8] sm:$0xff]
        %v307 = vld [vmem:[#allocation5] sm:$0xf]
        %v308 = vld [vmem:[#allocation5 + $0x4] sm:$0xf]
        %v309 = vld [vmem:[#allocation5 + $0x8] sm:$0xf]
        %v310 = vld [vmem:[#allocation5 + $0xc] sm:$0xf]
        %v311 = vld [vmem:[#allocation5 + $0x10] sm:$0xf]
        %v312 = vld [vmem:[#allocation5 + $0x14] sm:$0xf]
        %v313 = vld [vmem:[#allocation5 + $0x18] sm:$0xf]
        %v314 = vld [vmem:[#allocation5 + $0x1c] sm:$0xf]
        %v315 = vld [vmem:[#allocation5 + $0x20] sm:$0xf]
        %v316 = vld [vmem:[#allocation5 + $0x24] sm:$0xf]
        %v317 = vld [vmem:[#allocation5 + $0x28] sm:$0xf]
        %v318 = vld [vmem:[#allocation5 + $0x2c] sm:$0xf]
        %v319 = vld [vmem:[#allocation5 + $0x30] sm:$0xf]
        %v320 = vld [vmem:[#allocation5 + $0x34] sm:$0xf]
        %v321 = vld [vmem:[#allocation5 + $0x38] sm:$0xf]
        %v322 = vld [vmem:[#allocation5 + $0x3c] sm:$0xf]
        %v323 = vld [vmem:[#allocation5 + $0x40] sm:$0xf]
        %v324 = vld [vmem:[#allocation5 + $0x44] sm:$0xf]
        %v325 = vld [vmem:[#allocation5 + $0x48] sm:$0xf]
        %v326 = vld [vmem:[#allocation5 + $0x4c] sm:$0xf]
        %v327 = vld [vmem:[#allocation5 + $0x50] sm:$0xf]
        %v328 = vld [vmem:[#allocation5 + $0x54] sm:$0xf]
        %v329 = vld [vmem:[#allocation5 + $0x58] sm:$0xf]
        %v330 = vld [vmem:[#allocation5 + $0x5c] sm:$0xf]
        %v331 = vld [vmem:[#allocation5 + $0x60] sm:$0xf]
        %v332 = vld [vmem:[#allocation5 + $0x64] sm:$0xf]
        %v333 = vld [vmem:[#allocation5 + $0x68] sm:$0xf]
        %v334 = vld [vmem:[#allocation5 + $0x6c] sm:$0xf]
        %v335 = vld [vmem:[#allocation5 + $0x70] sm:$0xf]
        %v336 = vld [vmem:[#allocation5 + $0x74] sm:$0xf]
        %v337 = vld [vmem:[#allocation5 + $0x78] sm:$0xf]
        %v338 = vld [vmem:[#allocation5 + $0x7c] sm:$0xf]
        %v339 = vld [vmem:[%s240] sm:$0x1]
        %v341 = vlaneseq
        %v342 = vshrl.u32 %v341, 7
        %v343 = vsub.s32 0, %v342
        %v344 = vrot.slane %v339, %v343
        %v410 = vunpack.c.l.b16 %v243
        %v411 = vunpack.c.h.b16 %v243
        %v412 = vunpack.c.l.b16 %v244
        %v413 = vunpack.c.h.b16 %v244
        %v414 = vunpack.c.l.b16 %v245
        %v415 = vunpack.c.h.b16 %v245
        %v416 = vunpack.c.l.b16 %v246
        %v417 = vunpack.c.h.b16 %v246
        %v418 = vunpack.c.l.b16 %v247
        %v419 = vunpack.c.h.b16 %v247
        %v420 = vunpack.c.l.b16 %v248
        %v421 = vunpack.c.h.b16 %v248
        %v422 = vunpack.c.l.b16 %v249
        %v423 = vunpack.c.h.b16 %v249
        %v424 = vunpack.c.l.b16 %v250
        %v425 = vunpack.c.h.b16 %v250
        %v426 = vunpack.c.l.b16 %v251
        %v427 = vunpack.c.h.b16 %v251
        %v428 = vunpack.c.l.b16 %v252
        %v429 = vunpack.c.h.b16 %v252
        %v430 = vunpack.c.l.b16 %v253
        %v431 = vunpack.c.h.b16 %v253
        %v432 = vunpack.c.l.b16 %v254
        %v433 = vunpack.c.h.b16 %v254
        %v434 = vunpack.c.l.b16 %v255
        %v435 = vunpack.c.h.b16 %v255
        %v436 = vunpack.c.l.b16 %v256
        %v437 = vunpack.c.h.b16 %v256
        %v438 = vunpack.c.l.b16 %v257
        %v439 = vunpack.c.h.b16 %v257
        %v440 = vunpack.c.l.b16 %v258
        %v441 = vunpack.c.h.b16 %v258
        %v442 = vunpack.c.l.b16 %v259
        %v443 = vunpack.c.h.b16 %v259
        %v444 = vunpack.c.l.b16 %v260
        %v445 = vunpack.c.h.b16 %v260
        %v446 = vunpack.c.l.b16 %v261
        %v447 = vunpack.c.h.b16 %v261
        %v448 = vunpack.c.l.b16 %v262
        %v449 = vunpack.c.h.b16 %v262
        %v450 = vunpack.c.l.b16 %v263
        %v451 = vunpack.c.h.b16 %v263
        %v452 = vunpack.c.l.b16 %v264
        %v453 = vunpack.c.h.b16 %v264
        %v454 = vunpack.c.l.b16 %v265
        %v455 = vunpack.c.h.b16 %v265
        %v456 = vunpack.c.l.b16 %v266
        %v457 = vunpack.c.h.b16 %v266
        %v458 = vunpack.c.l.b16 %v267
        %v459 = vunpack.c.h.b16 %v267
        %v460 = vunpack.c.l.b16 %v268
        %v461 = vunpack.c.h.b16 %v268
        %v462 = vunpack.c.l.b16 %v269
        %v463 = vunpack.c.h.b16 %v269
        %v464 = vunpack.c.l.b16 %v270
        %v465 = vunpack.c.h.b16 %v270
        %v466 = vunpack.c.l.b16 %v271
        %v467 = vunpack.c.h.b16 %v271
        %v468 = vunpack.c.l.b16 %v272
        %v469 = vunpack.c.h.b16 %v272
        %v470 = vunpack.c.l.b16 %v273
        %v471 = vunpack.c.h.b16 %v273
        %v472 = vunpack.c.l.b16 %v274
        %v473 = vunpack.c.h.b16 %v274
        %v474 = vunpack.c.l.b16 %v275
        %v475 = vunpack.c.h.b16 %v275
        %v476 = vunpack.c.l.b16 %v276
        %v477 = vunpack.c.h.b16 %v276
        %v478 = vunpack.c.l.b16 %v277
        %v479 = vunpack.c.h.b16 %v277
        %v480 = vunpack.c.l.b16 %v278
        %v481 = vunpack.c.h.b16 %v278
        %v482 = vunpack.c.l.b16 %v279
        %v483 = vunpack.c.h.b16 %v279
        %v484 = vunpack.c.l.b16 %v280
        %v485 = vunpack.c.h.b16 %v280
        %v486 = vunpack.c.l.b16 %v281
        %v487 = vunpack.c.h.b16 %v281
        %v488 = vunpack.c.l.b16 %v282
        %v489 = vunpack.c.h.b16 %v282
        %v490 = vunpack.c.l.b16 %v283
        %v491 = vunpack.c.h.b16 %v283
        %v492 = vunpack.c.l.b16 %v284
        %v493 = vunpack.c.h.b16 %v284
        %v494 = vunpack.c.l.b16 %v285
        %v495 = vunpack.c.h.b16 %v285
        %v496 = vunpack.c.l.b16 %v286
        %v497 = vunpack.c.h.b16 %v286
        %v498 = vunpack.c.l.b16 %v287
        %v499 = vunpack.c.h.b16 %v287
        %v500 = vunpack.c.l.b16 %v288
        %v501 = vunpack.c.h.b16 %v288
        %v502 = vunpack.c.l.b16 %v289
        %v503 = vunpack.c.h.b16 %v289
        %v504 = vunpack.c.l.b16 %v290
        %v505 = vunpack.c.h.b16 %v290
        %v506 = vunpack.c.l.b16 %v291
        %v507 = vunpack.c.h.b16 %v291
        %v508 = vunpack.c.l.b16 %v292
        %v509 = vunpack.c.h.b16 %v292
        %v510 = vunpack.c.l.b16 %v293
        %v511 = vunpack.c.h.b16 %v293
        %v512 = vunpack.c.l.b16 %v294
        %v513 = vunpack.c.h.b16 %v294
        %v514 = vunpack.c.l.b16 %v295
        %v515 = vunpack.c.h.b16 %v295
        %v516 = vunpack.c.l.b16 %v296
        %v517 = vunpack.c.h.b16 %v296
        %v518 = vunpack.c.l.b16 %v297
        %v519 = vunpack.c.h.b16 %v297
        %v520 = vunpack.c.l.b16 %v298
        %v521 = vunpack.c.h.b16 %v298
        %v522 = vunpack.c.l.b16 %v299
        %v523 = vunpack.c.h.b16 %v299
        %v524 = vunpack.c.l.b16 %v300
        %v525 = vunpack.c.h.b16 %v300
        %v526 = vunpack.c.l.b16 %v301
        %v527 = vunpack.c.h.b16 %v301
        %v528 = vunpack.c.l.b16 %v302
        %v529 = vunpack.c.h.b16 %v302
        %v530 = vunpack.c.l.b16 %v303
        %v531 = vunpack.c.h.b16 %v303
        %v532 = vunpack.c.l.b16 %v304
        %v533 = vunpack.c.h.b16 %v304
        %v534 = vunpack.c.l.b16 %v305
        %v535 = vunpack.c.h.b16 %v305
        %v536 = vunpack.c.l.b16 %v306
        %v537 = vunpack.c.h.b16 %v306
        %v538 = vpack.c.b16 %v412, %v410
        %v539 = vpack.c.b16 %v413, %v411
        %v540 = vpack.c.b16 %v416, %v414
        %v541 = vpack.c.b16 %v417, %v415
        %v542 = vpack.c.b16 %v420, %v418
        %v543 = vpack.c.b16 %v421, %v419
        %v544 = vpack.c.b16 %v424, %v422
        %v545 = vpack.c.b16 %v425, %v423
        %v546 = vpack.c.b16 %v428, %v426
        %v547 = vpack.c.b16 %v429, %v427
        %v548 = vpack.c.b16 %v432, %v430
        %v549 = vpack.c.b16 %v433, %v431
        %v550 = vpack.c.b16 %v436, %v434
        %v551 = vpack.c.b16 %v437, %v435
        %v552 = vpack.c.b16 %v440, %v438
        %v553 = vpack.c.b16 %v441, %v439
        %v554 = vpack.c.b16 %v444, %v442
        %v555 = vpack.c.b16 %v445, %v443
        %v556 = vpack.c.b16 %v448, %v446
        %v557 = vpack.c.b16 %v449, %v447
        %v558 = vpack.c.b16 %v452, %v450
        %v559 = vpack.c.b16 %v453, %v451
        %v560 = vpack.c.b16 %v456, %v454
        %v561 = vpack.c.b16 %v457, %v455
        %v562 = vpack.c.b16 %v460, %v458
        %v563 = vpack.c.b16 %v461, %v459
        %v564 = vpack.c.b16 %v464, %v462
        %v565 = vpack.c.b16 %v465, %v463
        %v566 = vpack.c.b16 %v468, %v466
        %v567 = vpack.c.b16 %v469, %v467
        %v568 = vpack.c.b16 %v472, %v470
        %v569 = vpack.c.b16 %v473, %v471
        %v570 = vpack.c.b16 %v476, %v474
        %v571 = vpack.c.b16 %v477, %v475
        %v572 = vpack.c.b16 %v480, %v478
        %v573 = vpack.c.b16 %v481, %v479
        %v574 = vpack.c.b16 %v484, %v482
        %v575 = vpack.c.b16 %v485, %v483
        %v576 = vpack.c.b16 %v488, %v486
        %v577 = vpack.c.b16 %v489, %v487
        %v578 = vpack.c.b16 %v492, %v490
        %v579 = vpack.c.b16 %v493, %v491
        %v580 = vpack.c.b16 %v496, %v494
        %v581 = vpack.c.b16 %v497, %v495
        %v582 = vpack.c.b16 %v500, %v498
        %v583 = vpack.c.b16 %v501, %v499
        %v584 = vpack.c.b16 %v504, %v502
        %v585 = vpack.c.b16 %v505, %v503
        %v586 = vpack.c.b16 %v508, %v506
        %v587 = vpack.c.b16 %v509, %v507
        %v588 = vpack.c.b16 %v512, %v510
        %v589 = vpack.c.b16 %v513, %v511
        %v590 = vpack.c.b16 %v516, %v514
        %v591 = vpack.c.b16 %v517, %v515
        %v592 = vpack.c.b16 %v520, %v518
        %v593 = vpack.c.b16 %v521, %v519
        %v594 = vpack.c.b16 %v524, %v522
        %v595 = vpack.c.b16 %v525, %v523
        %v596 = vpack.c.b16 %v528, %v526
        %v597 = vpack.c.b16 %v529, %v527
        %v598 = vpack.c.b16 %v532, %v530
        %v599 = vpack.c.b16 %v533, %v531
        %v600 = vpack.c.b16 %v536, %v534
        %v601 = vpack.c.b16 %v537, %v535
        %v698 = vunpack.c.l.b16 %v307
        %v699 = vunpack.c.l.b16 %v308
        %v700 = vunpack.c.l.b16 %v309
        %v701 = vunpack.c.l.b16 %v310
        %v702 = vunpack.c.l.b16 %v311
        %v703 = vunpack.c.l.b16 %v312
        %v704 = vunpack.c.l.b16 %v313
        %v705 = vunpack.c.l.b16 %v314
        %v706 = vunpack.c.l.b16 %v315
        %v707 = vunpack.c.l.b16 %v316
        %v708 = vunpack.c.l.b16 %v317
        %v709 = vunpack.c.l.b16 %v318
        %v710 = vunpack.c.l.b16 %v319
        %v711 = vunpack.c.l.b16 %v320
        %v712 = vunpack.c.l.b16 %v321
        %v713 = vunpack.c.l.b16 %v322
        %v714 = vunpack.c.l.b16 %v323
        %v715 = vunpack.c.l.b16 %v324
        %v716 = vunpack.c.l.b16 %v325
        %v717 = vunpack.c.l.b16 %v326
        %v718 = vunpack.c.l.b16 %v327
        %v719 = vunpack.c.l.b16 %v328
        %v720 = vunpack.c.l.b16 %v329
        %v721 = vunpack.c.l.b16 %v330
        %v722 = vunpack.c.l.b16 %v331
        %v723 = vunpack.c.l.b16 %v332
        %v724 = vunpack.c.l.b16 %v333
        %v725 = vunpack.c.l.b16 %v334
        %v726 = vunpack.c.l.b16 %v335
        %v727 = vunpack.c.l.b16 %v336
        %v728 = vunpack.c.l.b16 %v337
        %v729 = vunpack.c.l.b16 %v338
        %v730 = vpack.c.b16 %v699, %v698
        %v731 = vpack.c.b16 %v701, %v700
        %v732 = vpack.c.b16 %v703, %v702
        %v733 = vpack.c.b16 %v705, %v704
        %v734 = vpack.c.b16 %v707, %v706
        %v735 = vpack.c.b16 %v709, %v708
        %v736 = vpack.c.b16 %v711, %v710
        %v737 = vpack.c.b16 %v713, %v712
        %v738 = vpack.c.b16 %v715, %v714
        %v739 = vpack.c.b16 %v717, %v716
        %v740 = vpack.c.b16 %v719, %v718
        %v741 = vpack.c.b16 %v721, %v720
        %v742 = vpack.c.b16 %v723, %v722
        %v743 = vpack.c.b16 %v725, %v724
        %v744 = vpack.c.b16 %v727, %v726
        %v745 = vpack.c.b16 %v729, %v728
        %762 = vmatprep.subr.bf16.mxu0 0
        %763 = vmatpush1.bf16.msra.mxu0 %v730
        %764 = vmatprep.subr.bf16.mxu0 0
        %765 = vmatpush1.bf16.msra.mxu0 %v731
        %766 = vmatprep.subr.bf16.mxu0 0
        %767 = vmatpush1.bf16.msra.mxu0 %v732
        %768 = vmatprep.subr.bf16.mxu0 0
        %769 = vmatpush1.bf16.msra.mxu0 %v733
        %770 = vmatprep.subr.bf16.mxu0 0
        %771 = vmatpush1.bf16.msra.mxu0 %v734
        %772 = vmatprep.subr.bf16.mxu0 0
        %773 = vmatpush1.bf16.msra.mxu0 %v735
        %774 = vmatprep.subr.bf16.mxu0 0
        %775 = vmatpush1.bf16.msra.mxu0 %v736
        %776 = vmatprep.subr.bf16.mxu0 0
        %777 = vmatpush1.bf16.msra.mxu0 %v737
        %778 = vmatprep.subr.bf16.mxu0 0
        %779 = vmatpush1.bf16.msra.mxu0 %v738
        %780 = vmatprep.subr.bf16.mxu0 0
        %781 = vmatpush1.bf16.msra.mxu0 %v739
        %782 = vmatprep.subr.bf16.mxu0 0
        %783 = vmatpush1.bf16.msra.mxu0 %v740
        %784 = vmatprep.subr.bf16.mxu0 0
        %785 = vmatpush1.bf16.msra.mxu0 %v741
        %786 = vmatprep.subr.bf16.mxu0 0
        %787 = vmatpush1.bf16.msra.mxu0 %v742
        %788 = vmatprep.subr.bf16.mxu0 0
        %789 = vmatpush1.bf16.msra.mxu0 %v743
        %790 = vmatprep.subr.bf16.mxu0 0
        %791 = vmatpush1.bf16.msra.mxu0 %v744
        %792 = vmatprep.subr.bf16.mxu0 0
        %793 = vmatpush1.bf16.msra.mxu0 %v745
        %794 = vmatprep.mubr.bf16.mxu0 %v539
        %795 = vmatmul.mubr.bf16.gmra.mrb[0].mxu0 %v538
        %v796 = vpop.f32.mrb[0].mxu0
        %v797 = vadd.f32 %v344, %v796
        %v798 = vpop.f32.mrb[0].mxu0
        %v799 = vpop.f32.mrb[0].mxu0
        %v800 = vadd.f32 %v344, %v799
        %v801 = vpop.f32.mrb[0].mxu0
        %802 = vmatprep.mubr.bf16.mxu0 %v541
        %803 = vmatmul.mubr.bf16.gmra.mrb[0].mxu0 %v540
        %v804 = vpop.f32.mrb[0].mxu0
        %v805 = vadd.f32 %v344, %v804
        %v806 = vpop.f32.mrb[0].mxu0
        %v807 = vpop.f32.mrb[0].mxu0
        %v808 = vadd.f32 %v344, %v807
        %v809 = vpop.f32.mrb[0].mxu0
        %810 = vmatprep.mubr.bf16.mxu0 %v543
        %811 = vmatmul.mubr.bf16.gmra.mrb[0].mxu0 %v542
        %v812 = vpop.f32.mrb[0].mxu0
        %v813 = vadd.f32 %v344, %v812
        %v814 = vpop.f32.mrb[0].mxu0
        %v815 = vpop.f32.mrb[0].mxu0
        %v816 = vadd.f32 %v344, %v815
        %v817 = vpop.f32.mrb[0].mxu0
        %818 = vmatprep.mubr.bf16.mxu0 %v545
        %819 = vmatmul.mubr.bf16.gmra.mrb[0].mxu0 %v544
        %v820 = vpop.f32.mrb[0].mxu0
        %v821 = vadd.f32 %v344, %v820
        %v822 = vpop.f32.mrb[0].mxu0
        %v823 = vpop.f32.mrb[0].mxu0
        %v824 = vadd.f32 %v344, %v823
        %v825 = vpop.f32.mrb[0].mxu0
        %826 = vmatprep.mubr.bf16.mxu0 %v547
        %827 = vmatmul.mubr.bf16.gmra.mrb[0].mxu0 %v546
        %v828 = vpop.f32.mrb[0].mxu0
        %v829 = vadd.f32 %v344, %v828
        %v830 = vpop.f32.mrb[0].mxu0
        %v831 = vpop.f32.mrb[0].mxu0
        %v832 = vadd.f32 %v344, %v831
        %v833 = vpop.f32.mrb[0].mxu0
        %834 = vmatprep.mubr.bf16.mxu0 %v549
        %835 = vmatmul.mubr.bf16.gmra.mrb[0].mxu0 %v548
        %v836 = vpop.f32.mrb[0].mxu0
        %v837 = vadd.f32 %v344, %v836
        %v838 = vpop.f32.mrb[0].mxu0
        %v839 = vpop.f32.mrb[0].mxu0
        %v840 = vadd.f32 %v344, %v839
        %v841 = vpop.f32.mrb[0].mxu0
        %842 = vmatprep.mubr.bf16.mxu0 %v551
        %843 = vmatmul.mubr.bf16.gmra.mrb[0].mxu0 %v550
        %v844 = vpop.f32.mrb[0].mxu0
        %v845 = vadd.f32 %v344, %v844
        %v846 = vpop.f32.mrb[0].mxu0
        %v847 = vpop.f32.mrb[0].mxu0
        %v848 = vadd.f32 %v344, %v847
        %v849 = vpop.f32.mrb[0].mxu0
        %850 = vmatprep.mubr.bf16.mxu0 %v553
        %851 = vmatmul.mubr.bf16.gmra.mrb[0].mxu0 %v552
        %v852 = vpop.f32.mrb[0].mxu0
        %v853 = vadd.f32 %v344, %v852
        %v854 = vpop.f32.mrb[0].mxu0
        %v855 = vpop.f32.mrb[0].mxu0
        %v856 = vadd.f32 %v344, %v855
        %v857 = vpop.f32.mrb[0].mxu0
        %858 = vmatprep.mubr.bf16.mxu0 %v555
        %859 = vmatmul.mubr.bf16.gmra.mrb[0].mxu0 %v554
        %v860 = vpop.f32.mrb[0].mxu0
        %v861 = vadd.f32 %v344, %v860
        %v862 = vpop.f32.mrb[0].mxu0
        %v863 = vpop.f32.mrb[0].mxu0
        %v864 = vadd.f32 %v344, %v863
        %v865 = vpop.f32.mrb[0].mxu0
        %866 = vmatprep.mubr.bf16.mxu0 %v557
        %867 = vmatmul.mubr.bf16.gmra.mrb[0].mxu0 %v556
        %v868 = vpop.f32.mrb[0].mxu0
        %v869 = vadd.f32 %v344, %v868
        %v870 = vpop.f32.mrb[0].mxu0
        %v871 = vpop.f32.mrb[0].mxu0
        %v872 = vadd.f32 %v344, %v871
        %v873 = vpop.f32.mrb[0].mxu0
        %874 = vmatprep.mubr.bf16.mxu0 %v559
        %875 = vmatmul.mubr.bf16.gmra.mrb[0].mxu0 %v558
        %v876 = vpop.f32.mrb[0].mxu0
        %v877 = vadd.f32 %v344, %v876
        %v878 = vpop.f32.mrb[0].mxu0
        %v879 = vpop.f32.mrb[0].mxu0
        %v880 = vadd.f32 %v344, %v879
        %v881 = vpop.f32.mrb[0].mxu0
        %882 = vmatprep.mubr.bf16.mxu0 %v561
        %883 = vmatmul.mubr.bf16.gmra.mrb[0].mxu0 %v560
        %v884 = vpop.f32.mrb[0].mxu0
        %v885 = vadd.f32 %v344, %v884
        %v886 = vpop.f32.mrb[0].mxu0
        %v887 = vpop.f32.mrb[0].mxu0
        %v888 = vadd.f32 %v344, %v887
        %v889 = vpop.f32.mrb[0].mxu0
        %890 = vmatprep.mubr.bf16.mxu0 %v563
        %891 = vmatmul.mubr.bf16.gmra.mrb[0].mxu0 %v562
        %v892 = vpop.f32.mrb[0].mxu0
        %v893 = vadd.f32 %v344, %v892
        %v894 = vpop.f32.mrb[0].mxu0
        %v895 = vpop.f32.mrb[0].mxu0
        %v896 = vadd.f32 %v344, %v895
        %v897 = vpop.f32.mrb[0].mxu0
        %898 = vmatprep.mubr.bf16.mxu0 %v565
        %899 = vmatmul.mubr.bf16.gmra.mrb[0].mxu0 %v564
        %v900 = vpop.f32.mrb[0].mxu0
        %v901 = vadd.f32 %v344, %v900
        %v902 = vpop.f32.mrb[0].mxu0
        %v903 = vpop.f32.mrb[0].mxu0
        %v904 = vadd.f32 %v344, %v903
        %v905 = vpop.f32.mrb[0].mxu0
        %906 = vmatprep.mubr.bf16.mxu0 %v567
        %907 = vmatmul.mubr.bf16.gmra.mrb[0].mxu0 %v566
        %v908 = vpop.f32.mrb[0].mxu0
        %v909 = vadd.f32 %v344, %v908
        %v910 = vpop.f32.mrb[0].mxu0
        %v911 = vpop.f32.mrb[0].mxu0
        %v912 = vadd.f32 %v344, %v911
        %v913 = vpop.f32.mrb[0].mxu0
        %914 = vmatprep.mubr.bf16.mxu0 %v569
        %915 = vmatmul.mubr.bf16.gmra.mrb[0].mxu0 %v568
        %v916 = vpop.f32.mrb[0].mxu0
        %v917 = vadd.f32 %v344, %v916
        %v918 = vpop.f32.mrb[0].mxu0
        %v919 = vpop.f32.mrb[0].mxu0
        %v920 = vadd.f32 %v344, %v919
        %v921 = vpop.f32.mrb[0].mxu0
        %922 = vmatprep.mubr.bf16.mxu0 %v571
        %923 = vmatmul.mubr.bf16.gmra.mrb[0].mxu0 %v570
        %v924 = vpop.f32.mrb[0].mxu0
        %v925 = vadd.f32 %v344, %v924
        %v926 = vpop.f32.mrb[0].mxu0
        %v927 = vpop.f32.mrb[0].mxu0
        %v928 = vadd.f32 %v344, %v927
        %v929 = vpop.f32.mrb[0].mxu0
        %930 = vmatprep.mubr.bf16.mxu0 %v573
        %931 = vmatmul.mubr.bf16.gmra.mrb[0].mxu0 %v572
        %v932 = vpop.f32.mrb[0].mxu0
        %v933 = vadd.f32 %v344, %v932
        %v934 = vpop.f32.mrb[0].mxu0
        %v935 = vpop.f32.mrb[0].mxu0
        %v936 = vadd.f32 %v344, %v935
        %v937 = vpop.f32.mrb[0].mxu0
        %938 = vmatprep.mubr.bf16.mxu0 %v575
        %939 = vmatmul.mubr.bf16.gmra.mrb[0].mxu0 %v574
        %v940 = vpop.f32.mrb[0].mxu0
        %v941 = vadd.f32 %v344, %v940
        %v942 = vpop.f32.mrb[0].mxu0
        %v943 = vpop.f32.mrb[0].mxu0
        %v944 = vadd.f32 %v344, %v943
        %v945 = vpop.f32.mrb[0].mxu0
        %946 = vmatprep.mubr.bf16.mxu0 %v577
        %947 = vmatmul.mubr.bf16.gmra.mrb[0].mxu0 %v576
        %v948 = vpop.f32.mrb[0].mxu0
        %v949 = vadd.f32 %v344, %v948
        %v950 = vpop.f32.mrb[0].mxu0
        %v951 = vpop.f32.mrb[0].mxu0
        %v952 = vadd.f32 %v344, %v951
        %v953 = vpop.f32.mrb[0].mxu0
        %954 = vmatprep.mubr.bf16.mxu0 %v579
        %955 = vmatmul.mubr.bf16.gmra.mrb[0].mxu0 %v578
        %v956 = vpop.f32.mrb[0].mxu0
        %v957 = vadd.f32 %v344, %v956
        %v958 = vpop.f32.mrb[0].mxu0
        %v959 = vpop.f32.mrb[0].mxu0
        %v960 = vadd.f32 %v344, %v959
        %v961 = vpop.f32.mrb[0].mxu0
        %962 = vmatprep.mubr.bf16.mxu0 %v581
        %963 = vmatmul.mubr.bf16.gmra.mrb[0].mxu0 %v580
        %v964 = vpop.f32.mrb[0].mxu0
        %v965 = vadd.f32 %v344, %v964
        %v966 = vpop.f32.mrb[0].mxu0
        %v967 = vpop.f32.mrb[0].mxu0
        %v968 = vadd.f32 %v344, %v967
        %v969 = vpop.f32.mrb[0].mxu0
        %970 = vmatprep.mubr.bf16.mxu0 %v583
        %971 = vmatmul.mubr.bf16.gmra.mrb[0].mxu0 %v582
        %v972 = vpop.f32.mrb[0].mxu0
        %v973 = vadd.f32 %v344, %v972
        %v974 = vpop.f32.mrb[0].mxu0
        %v975 = vpop.f32.mrb[0].mxu0
        %v976 = vadd.f32 %v344, %v975
        %v977 = vpop.f32.mrb[0].mxu0
        %978 = vmatprep.mubr.bf16.mxu0 %v585
        %979 = vmatmul.mubr.bf16.gmra.mrb[0].mxu0 %v584
        %v980 = vpop.f32.mrb[0].mxu0
        %v981 = vadd.f32 %v344, %v980
        %v982 = vpop.f32.mrb[0].mxu0
        %v983 = vpop.f32.mrb[0].mxu0
        %v984 = vadd.f32 %v344, %v983
        %v985 = vpop.f32.mrb[0].mxu0
        %986 = vmatprep.mubr.bf16.mxu0 %v587
        %987 = vmatmul.mubr.bf16.gmra.mrb[0].mxu0 %v586
        %v988 = vpop.f32.mrb[0].mxu0
        %v989 = vadd.f32 %v344, %v988
        %v990 = vpop.f32.mrb[0].mxu0
        %v991 = vpop.f32.mrb[0].mxu0
        %v992 = vadd.f32 %v344, %v991
        %v993 = vpop.f32.mrb[0].mxu0
        %994 = vmatprep.mubr.bf16.mxu0 %v589
        %995 = vmatmul.mubr.bf16.gmra.mrb[0].mxu0 %v588
        %v996 = vpop.f32.mrb[0].mxu0
        %v997 = vadd.f32 %v344, %v996
        %v998 = vpop.f32.mrb[0].mxu0
        %v999 = vpop.f32.mrb[0].mxu0
        %v1000 = vadd.f32 %v344, %v999
        %v1001 = vpop.f32.mrb[0].mxu0
        %1002 = vmatprep.mubr.bf16.mxu0 %v591
        %1003 = vmatmul.mubr.bf16.gmra.mrb[0].mxu0 %v590
        %v1004 = vpop.f32.mrb[0].mxu0
        %v1005 = vadd.f32 %v344, %v1004
        %v1006 = vpop.f32.mrb[0].mxu0
        %v1007 = vpop.f32.mrb[0].mxu0
        %v1008 = vadd.f32 %v344, %v1007
        %v1009 = vpop.f32.mrb[0].mxu0
        %1010 = vmatprep.mubr.bf16.mxu0 %v593
        %1011 = vmatmul.mubr.bf16.gmra.mrb[0].mxu0 %v592
        %v1012 = vpop.f32.mrb[0].mxu0
        %v1013 = vadd.f32 %v344, %v1012
        %v1014 = vpop.f32.mrb[0].mxu0
        %v1015 = vpop.f32.mrb[0].mxu0
        %v1016 = vadd.f32 %v344, %v1015
        %v1017 = vpop.f32.mrb[0].mxu0
        %1018 = vmatprep.mubr.bf16.mxu0 %v595
        %1019 = vmatmul.mubr.bf16.gmra.mrb[0].mxu0 %v594
        %v1020 = vpop.f32.mrb[0].mxu0
        %v1021 = vadd.f32 %v344, %v1020
        %v1022 = vpop.f32.mrb[0].mxu0
        %v1023 = vpop.f32.mrb[0].mxu0
        %v1024 = vadd.f32 %v344, %v1023
        %v1025 = vpop.f32.mrb[0].mxu0
        %1026 = vmatprep.mubr.bf16.mxu0 %v597
        %1027 = vmatmul.mubr.bf16.gmra.mrb[0].mxu0 %v596
        %v1028 = vpop.f32.mrb[0].mxu0
        %v1029 = vadd.f32 %v344, %v1028
        %v1030 = vpop.f32.mrb[0].mxu0
        %v1031 = vpop.f32.mrb[0].mxu0
        %v1032 = vadd.f32 %v344, %v1031
        %v1033 = vpop.f32.mrb[0].mxu0
        %1034 = vmatprep.mubr.bf16.mxu0 %v599
        %1035 = vmatmul.mubr.bf16.gmra.mrb[0].mxu0 %v598
        %v1036 = vpop.f32.mrb[0].mxu0
        %v1037 = vadd.f32 %v344, %v1036
        %v1038 = vpop.f32.mrb[0].mxu0
        %v1039 = vpop.f32.mrb[0].mxu0
        %v1040 = vadd.f32 %v344, %v1039
        %v1041 = vpop.f32.mrb[0].mxu0
        %1042 = vmatprep.mubr.bf16.mxu0 %v601
        %1043 = vmatmul.mubr.bf16.gmra.mrb[0].mxu0 %v600
        %v1044 = vpop.f32.mrb[0].mxu0
        %v1045 = vadd.f32 %v344, %v1044
        %v1046 = vpop.f32.mrb[0].mxu0
        %v1047 = vpop.f32.mrb[0].mxu0
        %v1048 = vadd.f32 %v344, %v1047
        %v1049 = vpop.f32.mrb[0].mxu0
        %1050 = vdwg.mxu0
        %v1051 = vmax.f32 %v797, 0.0
        %v1052 = vmax.f32 %v800, 0.0
        %v1053 = vmax.f32 %v805, 0.0
        %v1054 = vmax.f32 %v808, 0.0
        %v1055 = vmax.f32 %v813, 0.0
        %v1056 = vmax.f32 %v816, 0.0
        %v1057 = vmax.f32 %v821, 0.0
        %v1058 = vmax.f32 %v824, 0.0
        %v1059 = vmax.f32 %v829, 0.0
        %v1060 = vmax.f32 %v832, 0.0
        %v1061 = vmax.f32 %v837, 0.0
        %v1062 = vmax.f32 %v840, 0.0
        %v1063 = vmax.f32 %v845, 0.0
        %v1064 = vmax.f32 %v848, 0.0
        %v1065 = vmax.f32 %v853, 0.0
        %v1066 = vmax.f32 %v856, 0.0
        %v1067 = vmax.f32 %v861, 0.0
        %v1068 = vmax.f32 %v864, 0.0
        %v1069 = vmax.f32 %v869, 0.0
        %v1070 = vmax.f32 %v872, 0.0
        %v1071 = vmax.f32 %v877, 0.0
        %v1072 = vmax.f32 %v880, 0.0
        %v1073 = vmax.f32 %v885, 0.0
        %v1074 = vmax.f32 %v888, 0.0
        %v1075 = vmax.f32 %v893, 0.0
        %v1076 = vmax.f32 %v896, 0.0
        %v1077 = vmax.f32 %v901, 0.0
        %v1078 = vmax.f32 %v904, 0.0
        %v1079 = vmax.f32 %v909, 0.0
        %v1080 = vmax.f32 %v912, 0.0
        %v1081 = vmax.f32 %v917, 0.0
        %v1082 = vmax.f32 %v920, 0.0
        %v1083 = vmax.f32 %v925, 0.0
        %v1084 = vmax.f32 %v928, 0.0
        %v1085 = vmax.f32 %v933, 0.0
        %v1086 = vmax.f32 %v936, 0.0
        %v1087 = vmax.f32 %v941, 0.0
        %v1088 = vmax.f32 %v944, 0.0
        %v1089 = vmax.f32 %v949, 0.0
        %v1090 = vmax.f32 %v952, 0.0
        %v1091 = vmax.f32 %v957, 0.0
        %v1092 = vmax.f32 %v960, 0.0
        %v1093 = vmax.f32 %v965, 0.0
        %v1094 = vmax.f32 %v968, 0.0
        %v1095 = vmax.f32 %v973, 0.0
        %v1096 = vmax.f32 %v976, 0.0
        %v1097 = vmax.f32 %v981, 0.0
        %v1098 = vmax.f32 %v984, 0.0
        %v1099 = vmax.f32 %v989, 0.0
        %v1100 = vmax.f32 %v992, 0.0
        %v1101 = vmax.f32 %v997, 0.0
        %v1102 = vmax.f32 %v1000, 0.0
        %v1103 = vmax.f32 %v1005, 0.0
        %v1104 = vmax.f32 %v1008, 0.0
        %v1105 = vmax.f32 %v1013, 0.0
        %v1106 = vmax.f32 %v1016, 0.0
        %v1107 = vmax.f32 %v1021, 0.0
        %v1108 = vmax.f32 %v1024, 0.0
        %v1109 = vmax.f32 %v1029, 0.0
        %v1110 = vmax.f32 %v1032, 0.0
        %v1111 = vmax.f32 %v1037, 0.0
        %v1112 = vmax.f32 %v1040, 0.0
        %v1113 = vmax.f32 %v1045, 0.0
        %v1114 = vmax.f32 %v1048, 0.0
        %1115 = vst [vmem:[%s236] sm:$0xff] %v1051
        %1116 = vst [vmem:[%s236 + $0x8] sm:$0xff] %v1052
        %1117 = vst [vmem:[%s236 + $0x10] sm:$0xff] %v1053
        %1118 = vst [vmem:[%s236 + $0x18] sm:$0xff] %v1054
        %1119 = vst [vmem:[%s236 + $0x20] sm:$0xff] %v1055
        %1120 = vst [vmem:[%s236 + $0x28] sm:$0xff] %v1056
        %1121 = vst [vmem:[%s236 + $0x30] sm:$0xff] %v1057
        %1122 = vst [vmem:[%s236 + $0x38] sm:$0xff] %v1058
        %1123 = vst [vmem:[%s236 + $0x40] sm:$0xff] %v1059
        %1124 = vst [vmem:[%s236 + $0x48] sm:$0xff] %v1060
        %1125 = vst [vmem:[%s236 + $0x50] sm:$0xff] %v1061
        %1126 = vst [vmem:[%s236 + $0x58] sm:$0xff] %v1062
        %1127 = vst [vmem:[%s236 + $0x60] sm:$0xff] %v1063
        %1128 = vst [vmem:[%s236 + $0x68] sm:$0xff] %v1064
        %1129 = vst [vmem:[%s236 + $0x70] sm:$0xff] %v1065
        %1130 = vst [vmem:[%s236 + $0x78] sm:$0xff] %v1066
        %1131 = vst [vmem:[%s236 + $0x80] sm:$0xff] %v1067
        %1132 = vst [vmem:[%s236 + $0x88] sm:$0xff] %v1068
        %1133 = vst [vmem:[%s236 + $0x90] sm:$0xff] %v1069
        %1134 = vst [vmem:[%s236 + $0x98] sm:$0xff] %v1070
        %1135 = vst [vmem:[%s236 + $0xa0] sm:$0xff] %v1071
        %1136 = vst [vmem:[%s236 + $0xa8] sm:$0xff] %v1072
        %1137 = vst [vmem:[%s236 + $0xb0] sm:$0xff] %v1073
        %1138 = vst [vmem:[%s236 + $0xb8] sm:$0xff] %v1074
        %1139 = vst [vmem:[%s236 + $0xc0] sm:$0xff] %v1075
        %1140 = vst [vmem:[%s236 + $0xc8] sm:$0xff] %v1076
        %1141 = vst [vmem:[%s236 + $0xd0] sm:$0xff] %v1077
        %1142 = vst [vmem:[%s236 + $0xd8] sm:$0xff] %v1078
        %1143 = vst [vmem:[%s236 + $0xe0] sm:$0xff] %v1079
        %1144 = vst [vmem:[%s236 + $0xe8] sm:$0xff] %v1080
        %1145 = vst [vmem:[%s236 + $0xf0] sm:$0xff] %v1081
        %1146 = vst [vmem:[%s236 + $0xf8] sm:$0xff] %v1082
        %1147 = vst [vmem:[%s236 + $0x100] sm:$0xff] %v1083
        %1148 = vst [vmem:[%s236 + $0x108] sm:$0xff] %v1084
        %1149 = vst [vmem:[%s236 + $0x110] sm:$0xff] %v1085
        %1150 = vst [vmem:[%s236 + $0x118] sm:$0xff] %v1086
        %1151 = vst [vmem:[%s236 + $0x120] sm:$0xff] %v1087
        %1152 = vst [vmem:[%s236 + $0x128] sm:$0xff] %v1088
        %1153 = vst [vmem:[%s236 + $0x130] sm:$0xff] %v1089
        %1154 = vst [vmem:[%s236 + $0x138] sm:$0xff] %v1090
        %1155 = vst [vmem:[%s236 + $0x140] sm:$0xff] %v1091
        %1156 = vst [vmem:[%s236 + $0x148] sm:$0xff] %v1092
        %1157 = vst [vmem:[%s236 + $0x150] sm:$0xff] %v1093
        %1158 = vst [vmem:[%s236 + $0x158] sm:$0xff] %v1094
        %1159 = vst [vmem:[%s236 + $0x160] sm:$0xff] %v1095
        %1160 = vst [vmem:[%s236 + $0x168] sm:$0xff] %v1096
        %1161 = vst [vmem:[%s236 + $0x170] sm:$0xff] %v1097
        %1162 = vst [vmem:[%s236 + $0x178] sm:$0xff] %v1098
        %1163 = vst [vmem:[%s236 + $0x180] sm:$0xff] %v1099
        %1164 = vst [vmem:[%s236 + $0x188] sm:$0xff] %v1100
        %1165 = vst [vmem:[%s236 + $0x190] sm:$0xff] %v1101
        %1166 = vst [vmem:[%s236 + $0x198] sm:$0xff] %v1102
        %1167 = vst [vmem:[%s236 + $0x1a0] sm:$0xff] %v1103
        %1168 = vst [vmem:[%s236 + $0x1a8] sm:$0xff] %v1104
        %1169 = vst [vmem:[%s236 + $0x1b0] sm:$0xff] %v1105
        %1170 = vst [vmem:[%s236 + $0x1b8] sm:$0xff] %v1106
        %1171 = vst [vmem:[%s236 + $0x1c0] sm:$0xff] %v1107
        %1172 = vst [vmem:[%s236 + $0x1c8] sm:$0xff] %v1108
        %1173 = vst [vmem:[%s236 + $0x1d0] sm:$0xff] %v1109
        %1174 = vst [vmem:[%s236 + $0x1d8] sm:$0xff] %v1110
        %1175 = vst [vmem:[%s236 + $0x1e0] sm:$0xff] %v1111
        %1176 = vst [vmem:[%s236 + $0x1e8] sm:$0xff] %v1112
        %1177 = vst [vmem:[%s236 + $0x1f0] sm:$0xff] %v1113
        %1178 = vst [vmem:[%s236 + $0x1f8] sm:$0xff] %v1114
        %s1179 = sand.u32 %s121, 1
        %s1180 = scalar_lea.sflag [#allocation4], %s1179
        %s1181 = sand.u32 %s121, 1
        %s1182 = smul.addr %s1181, 512
        %s1183 = scalar_lea.vmem [#allocation7], %s1182
        // Predicated region
        $region41: #{tpu_custom_call.1} parent=31 // pred_check
          %p1184 = pneg %p131
        $region42: #{tpu_custom_call.1} parent=31 // pred_check_branch
          %1186 = sbr.rel (%p1184) target = $region44
        $region43: #{tpu_custom_call.1} parent=31 // pred_region
          %s1187 = smul.u32 64, %s25
          %s1189 = ssub.s32 8192, 8192
          %1190 = vsyncadd %s1180, %s1189
          %s1191 = sadd.s32 %s26, %s1187
          %s1192 = smul.addr %s1191, 128
          %s1193 = scalar_lea.hbm %s3, %s1192
          %s1194 = sshll.u32 %s1183, 4
          %s1195 = int_to_ptr.vmem [resolvable:$true] %s1194
          %1200 = dma.vmem_to_hbm [thread:$0]  %s1195, 8192, %s1193, %s1180, 128, 128, 8
        $region44: #{tpu_custom_call.1} parent=31 // pred_fallthru
          _
      $region32: #{tpu_custom_call.1} parent=5 // pred_fallthru
        _
      %p1201 = scmp.le.s32.totalorder 2, %s16
      // Predicated region
      $region45: #{tpu_custom_call.1} parent=5 // pred_check
        %p1202 = pneg %p1201
      $region46: #{tpu_custom_call.1} parent=5 // pred_check_branch
        %1204 = sbr.rel (%p1202) target = $region48
      $region47: #{tpu_custom_call.1} parent=5 // pred_region
        %s1205 = ssub.s32 %s16, 2
        // Predicated region
        $region49: #{tpu_custom_call.1} parent=47 // pred_check
          %p1206 = pneg %p137
        $region50: #{tpu_custom_call.1} parent=47 // pred_check_branch
          %1208 = sbr.rel (%p1206) target = $region52
        $region51: #{tpu_custom_call.1} parent=47 // pred_region
          %s1209 = sand.u32 %s122, 1
          %s1210 = scalar_lea.sflag [#allocation4], %s1209
          %s1211 = sand.u32 %s122, 1
          %s1212 = smul.addr %s1211, 512
          %s1213 = scalar_lea.vmem [#allocation7], %s1212
          %1214 = dma.done %s1210, 8192
        $region52: #{tpu_custom_call.1} parent=47 // pred_fallthru
          _
      $region48: #{tpu_custom_call.1} parent=5 // pred_fallthru
        _
    $region6: #{tpu_custom_call.1} parent=1 // loop_footer
      %s20 = sadd.s32 1, %s16
    $region7: #{tpu_custom_call.1} parent=1 // loop_footer_branch
      %15 = sbr.rel target = $region3
    $region8: #{tpu_custom_call.1} parent=1 // loop_exit
      _
    %1215 = vsyncpa [#allocation3], 1
    %s1216 = scalar_lea.sflag [#allocation3], 1
    %1217 = vsyncpa %s1216, 1
    %1218 = vsyncpa [#allocation6], 1
    %1219 = vsyncpa [#allocation4], 1
    %s1220 = scalar_lea.sflag [#allocation4], 1
    %1221 = vsyncpa %s1220, 1

</llo_original>
